<compile_context>
chip_gen: v5e
topology: v5e:2x2
jax: 0.10.0
libtpu: 0.0.40
codegen_flags: <defaults>
</compile_context>

<pallas_src>
from functools import partial

import jax
import jax.numpy as jnp
from jax import lax
from jax.experimental import pallas as pl
from jax.experimental.pallas import tpu as pltpu


def _round_up(x, m):
    return (x + m - 1) // m * m


def _make_gru_fc_kernel(seq_len, b_pad, hidden):
    """Fused GRU + FC kernel (closure over static sizes)."""
    H = hidden

    def kernel(x_ref, wih_ref, whh_ref, bih_ref, bhhn_ref, wfc_ref, bfc_ref,
               out_ref, gi_ref):
        # x_ref   : (S*Bp, I)    bf16  all timesteps, batch padded to Bp rows
        # wih_ref : (I, Gp)      bf16  input->gates, packed cols [r|z|n|0-pad]
        # whh_ref : (H, Gp)      bf16  hidden->gates, same packing (K = true H)
        # bih_ref : (1, Gp)      f32   b_ih with b_hh[r], b_hh[z] folded in
        # bhhn_ref: (1, H)       f32   b_hh[n] (must stay inside r*(...))
        # wfc_ref : (H, Op)      bf16  fc weight
        # bfc_ref : (1, Op)      f32
        # out_ref : (Bp, Op)     f32   fc(h_last), lane-dense store
        # gi_ref  : (S*Bp, Gp)   f32   scratch: hoisted input projection

        # Hoisted input projection: one MXU matmul over ALL timesteps.
        gi_ref[...] = (
            jnp.dot(x_ref[...], wih_ref[...],
                    preferred_element_type=jnp.float32)
            + bih_ref[...])

        whh = whh_ref[...]                       # (H, Gp), resident in vregs
        # Hoist the (1,H)->(Bp,H) bias broadcast out of the unrolled loop.
        bhh_n = jnp.broadcast_to(bhhn_ref[...], (b_pad, H))

        def step(t, h):                          # h: (Bp, H) f32
            row = pl.multiple_of(t * b_pad, b_pad)
            gi = gi_ref[pl.ds(row, b_pad), :]    # (Bp, Gp) f32
            # Single-tile recurrent matmul: (Bp,H) x (H,Gp), K = true H.
            gh = jnp.dot(h.astype(jnp.bfloat16), whh,
                         preferred_element_type=jnp.float32)
            gi_r = gi[:, 0:H]
            gi_z = gi[:, H:2 * H]
            gi_n = gi[:, 2 * H:3 * H]
            gh_r = gh[:, 0:H]
            gh_z = gh[:, H:2 * H]
            gh_n = gh[:, 2 * H:3 * H]
            # sigmoid(x) == 0.5*tanh(0.5*x) + 0.5  (one EUP push per gate).
            r = 0.5 * jnp.tanh(0.5 * (gi_r + gh_r)) + 0.5
            z = 0.5 * jnp.tanh(0.5 * (gi_z + gh_z)) + 0.5
            n = jnp.tanh(gi_n + r * (gh_n + bhh_n))
            return (1.0 - z) * n + z * h         # gate math stays f32 (VPU)

        h0 = jnp.zeros((b_pad, H), jnp.float32)
        h_last = lax.fori_loop(0, seq_len, step, h0,
                               unroll=min(seq_len, 8))

        # Fused FC on the last hidden state; lane-dense (Bp, Op) store.
        out_ref[...] = (
            jnp.dot(h_last.astype(jnp.bfloat16), wfc_ref[...],
                    preferred_element_type=jnp.float32)
            + bfc_ref[...])

    return kernel


def pack_params(params):
    """One-time packing of PyTorch-layout GRU/FC params (run at init, not per call)."""
    f32, bf16 = jnp.float32, jnp.bfloat16
    w_ih, w_hh = params["w_ih"], params["w_hh"]
    b_ih, b_hh = params["b_ih"], params["b_hh"]
    w_fc, b_fc = params["w_fc"], params["b_fc"]

    hidden = w_hh.shape[1]
    out_sz = w_fc.shape[0]
    gate_pad = _round_up(3 * hidden, 128)        # all gates in one lane slab
    o_pad = _round_up(out_sz, 128)

    # (3H, D) -> (D, Gp), gate order r|z|n already matches PyTorch row order.
    wih_p = (jnp.zeros((w_ih.shape[1], gate_pad), f32)
             .at[:, :3 * hidden].set(w_ih.T.astype(f32)).astype(bf16))
    whh_p = (jnp.zeros((hidden, gate_pad), f32)
             .at[:, :3 * hidden].set(w_hh.T.astype(f32)).astype(bf16))

    # Fold b_hh's r/z slices into b_ih (exact); keep b_hh[n] separate.
    bih_fold = (b_ih.astype(f32)
                .at[:2 * hidden].add(b_hh[:2 * hidden].astype(f32)))
    bih_p = jnp.zeros((1, gate_pad), f32).at[0, :3 * hidden].set(bih_fold)
    bhhn_p = b_hh[2 * hidden:3 * hidden].astype(f32).reshape(1, hidden)

    wfc_p = (jnp.zeros((hidden, o_pad), f32)
             .at[:, :out_sz].set(w_fc.T.astype(f32)).astype(bf16))
    bfc_p = jnp.zeros((1, o_pad), f32).at[0, :out_sz].set(b_fc.astype(f32))

    return {"wih": wih_p, "whh": whh_p, "bih": bih_p, "bhhn": bhhn_p,
            "wfc": wfc_p, "bfc": bfc_p}


@partial(jax.jit, static_argnames=("output_size",))
def rnn_regressor_forward(x, packed, *, output_size):
    """x: (seq_len, batch, input_size) f32.  Returns (output_size, batch)-shaped result."""
    seq_len, batch, input_size = x.shape
    hidden = packed["whh"].shape[0]
    gate_pad = packed["whh"].shape[1]
    o_pad = packed["wfc"].shape[1]
    b_pad = _round_up(batch, 8)                  # sublane-aligned row stride

    # Cheap per-call glue: pad batch to 8 rows, flatten time, cast to bf16.
    # NO feature-dim padding in HBM (lanes are padded in-vreg by Mosaic).
    x_p = (jnp.zeros((seq_len, b_pad, input_size), jnp.bfloat16)
           .at[:, :batch, :].set(x.astype(jnp.bfloat16)))
    x2d = x_p.reshape(seq_len * b_pad, input_size)

    kernel = _make_gru_fc_kernel(seq_len, b_pad, hidden)
    vmem = pltpu.MemorySpace.VMEM
    out_pad = pl.pallas_call(
        kernel,
        out_shape=jax.ShapeDtypeStruct((b_pad, o_pad), jnp.float32),
        in_specs=[pl.BlockSpec(memory_space=vmem)] * 7,
        out_specs=pl.BlockSpec(memory_space=vmem),
        scratch_shapes=[pltpu.VMEM((seq_len * b_pad, gate_pad), jnp.float32)],
        compiler_params=pltpu.CompilerParams(
            vmem_limit_bytes=32 * 1024 * 1024),
    )(x2d, packed["wih"], packed["whh"], packed["bih"], packed["bhhn"],
      packed["wfc"], packed["bfc"])

    fc_out = out_pad[:batch, :output_size]
    # Matches the module's `fc_output.reshape(fc_output.shape[1], -1)`
    # (raw reshape, intentionally not a transpose).
    return fc_out.reshape(output_size, -1)


def _reference_forward(x, params):
    """Pure-JAX f32 reference (lax.scan GRU) for correctness checking."""
    w_ih, w_hh, b_ih, b_hh, w_fc, b_fc = (
        params["w_ih"], params["w_hh"], params["b_ih"],
        params["b_hh"], params["w_fc"], params["b_fc"])
    hidden_size = w_hh.shape[1]
    batch = x.shape[1]
    h0 = jnp.zeros((batch, hidden_size), jnp.float32)

    def step(h, x_t):
        gi = x_t @ w_ih.T + b_ih
        gh = h @ w_hh.T + b_hh
        i_r, i_z, i_n = jnp.split(gi, 3, axis=-1)
        h_r, h_z, h_n = jnp.split(gh, 3, axis=-1)
        r = jax.nn.sigmoid(i_r + h_r)
        z = jax.nn.sigmoid(i_z + h_z)
        n = jnp.tanh(i_n + r * h_n)
        h_new = (1.0 - z) * n + z * h
        return h_new, h_new

    h_last, _ = lax.scan(step, h0, x)
    fc_out = h_last @ w_fc.T + b_fc
    return fc_out.reshape(w_fc.shape[0], -1)


def init_params(key, input_size, hidden_size, output_size):
    """Deterministic init mimicking PyTorch's U(-1/sqrt(H), 1/sqrt(H))."""
    k = jax.random.split(key, 6)
    s = 1.0 / jnp.sqrt(hidden_size)
    u = lambda kk, shape: jax.random.uniform(kk, shape, jnp.float32, -s, s)
    return {
        "w_ih": u(k[0], (3 * hidden_size, input_size)),
        "w_hh": u(k[1], (3 * hidden_size, hidden_size)),
        "b_ih": u(k[2], (3 * hidden_size,)),
        "b_hh": u(k[3], (3 * hidden_size,)),
        "w_fc": u(k[4], (output_size, hidden_size)),
        "b_fc": u(k[5], (output_size,)),
    }


if __name__ == "__main__":
    seq_len, batch, input_size = 8, 4, 16
    hidden_size, output_size = 32, 8

    key = jax.random.PRNGKey(0)
    kx, kp = jax.random.split(key)
    x = jax.random.normal(kx, (seq_len, batch, input_size), jnp.float32)
    params = init_params(kp, input_size, hidden_size, output_size)

    packed = jax.tree.map(jax.block_until_ready, pack_params(params))  # once, at init

    out = jax.block_until_ready(
        rnn_regressor_forward(x, packed, output_size=output_size))
    ref = jax.block_until_ready(_reference_forward(x, params))

    assert out.shape == (output_size, batch), out.shape
    # bf16 MXU operands vs. f32 reference -> loosened tolerance.
    max_err = jnp.max(jnp.abs(out - ref))
    assert jnp.allclose(out, ref, atol=3e-2, rtol=3e-2), f"max abs err {max_err}"
    print("KERNEL_OK")
</pallas_src>

<mosaic_0001>
module attributes {stable_mosaic.version = 11 : i64} {
  func.func @kernel(%arg0: memref<64x16xbf16, #tpu.memory_space<vmem>>, %arg1: memref<16x128xbf16, #tpu.memory_space<vmem>>, %arg2: memref<32x128xbf16, #tpu.memory_space<vmem>>, %arg3: memref<1x128xf32, #tpu.memory_space<vmem>>, %arg4: memref<1x32xf32, #tpu.memory_space<vmem>>, %arg5: memref<32x128xbf16, #tpu.memory_space<vmem>>, %arg6: memref<1x128xf32, #tpu.memory_space<vmem>>, %arg7: memref<8x128xf32, #tpu.memory_space<vmem>>, %arg8: memref<64x128xf32, #tpu.memory_space<vmem>>) attributes {dimension_semantics = [], scalar_prefetch = 0 : i64, scratch_operands = 1 : i64, tpu.core_type = #tpu.core_type<tc>} {
    %c0 = arith.constant 0 : index
    %c0_0 = arith.constant 0 : index
    %0 = vector.load %arg0[%c0, %c0_0] : memref<64x16xbf16, #tpu.memory_space<vmem>>, vector<64x16xbf16>
    %c0_1 = arith.constant 0 : index
    %c0_2 = arith.constant 0 : index
    %1 = vector.load %arg1[%c0_1, %c0_2] : memref<16x128xbf16, #tpu.memory_space<vmem>>, vector<16x128xbf16>
    %cst = arith.constant dense<0.000000e+00> : vector<64x128xf32>
    %2 = tpu.matmul %0, %1, %cst {dimension_numbers = #tpu.dot_dimension_numbers<[1], [0], [0], [1], [0, 0, 1, 1], [], []>} : vector<64x16xbf16>, vector<16x128xbf16>, vector<64x128xf32> -> vector<64x128xf32>
    %c0_3 = arith.constant 0 : index
    %c0_4 = arith.constant 0 : index
    %3 = vector.load %arg3[%c0_3, %c0_4] : memref<1x128xf32, #tpu.memory_space<vmem>>, vector<1x128xf32>
    %4 = vector.broadcast %3 : vector<1x128xf32> to vector<64x128xf32>
    %5 = arith.addf %2, %4 : vector<64x128xf32>
    %c0_5 = arith.constant 0 : index
    %c0_6 = arith.constant 0 : index
    %6 = vector.load %arg8[%c0_5, %c0_6] : memref<64x128xf32, #tpu.memory_space<vmem>>, vector<64x128xf32>
    tpu.vector_store %arg8[%c0_5, %c0_6], %5 {strides = array<i32>} : memref<64x128xf32, #tpu.memory_space<vmem>>, vector<64x128xf32>,
    %c0_7 = arith.constant 0 : index
    %c0_8 = arith.constant 0 : index
    %7 = vector.load %arg2[%c0_7, %c0_8] : memref<32x128xbf16, #tpu.memory_space<vmem>>, vector<32x128xbf16>
    %c0_9 = arith.constant 0 : index
    %c0_10 = arith.constant 0 : index
    %8 = vector.load %arg4[%c0_9, %c0_10] : memref<1x32xf32, #tpu.memory_space<vmem>>, vector<1x32xf32>
    %9 = vector.shape_cast %8 : vector<1x32xf32> to vector<1x32xf32>
    %10 = vector.broadcast %9 : vector<1x32xf32> to vector<8x32xf32>
    %cst_11 = arith.constant 0.000000e+00 : f32
    %11 = vector.broadcast %cst_11 : f32 to vector<8x32xf32>
    %c0_i32 = arith.constant 0 : i32
    %c8_i32 = arith.constant 8 : i32
    %12 = arith.muli %c0_i32, %c8_i32 : i32
    %13 = tpu.assume_multiple %12, 8 : i32
    %14 = arith.index_cast %13 : i32 to index
    %c0_12 = arith.constant 0 : index
    %15 = vector.load %arg8[%14, %c0_12] : memref<64x128xf32, #tpu.memory_space<vmem>>, vector<8x128xf32>
    %16 = arith.truncf %11 : vector<8x32xf32> to vector<8x32xbf16>
    %cst_13 = arith.constant dense<0.000000e+00> : vector<8x128xf32>
    %17 = tpu.matmul %16, %7, %cst_13 {dimension_numbers = #tpu.dot_dimension_numbers<[1], [0], [0], [1], [0, 0, 1, 1], [], []>} : vector<8x32xbf16>, vector<32x128xbf16>, vector<8x128xf32> -> vector<8x128xf32>
    %18 = vector.extract_strided_slice %15 {offsets = [0, 0], sizes = [8, 32], strides = [1, 1]} : vector<8x128xf32> to vector<8x32xf32>
    %19 = vector.extract_strided_slice %15 {offsets = [0, 32], sizes = [8, 32], strides = [1, 1]} : vector<8x128xf32> to vector<8x32xf32>
    %20 = vector.extract_strided_slice %15 {offsets = [0, 64], sizes = [8, 32], strides = [1, 1]} : vector<8x128xf32> to vector<8x32xf32>
    %21 = vector.extract_strided_slice %17 {offsets = [0, 0], sizes = [8, 32], strides = [1, 1]} : vector<8x128xf32> to vector<8x32xf32>
    %22 = vector.extract_strided_slice %17 {offsets = [0, 32], sizes = [8, 32], strides = [1, 1]} : vector<8x128xf32> to vector<8x32xf32>
    %23 = vector.extract_strided_slice %17 {offsets = [0, 64], sizes = [8, 32], strides = [1, 1]} : vector<8x128xf32> to vector<8x32xf32>
    %24 = arith.addf %18, %21 : vector<8x32xf32>
    %cst_14 = arith.constant 5.000000e-01 : f32
    %25 = vector.broadcast %cst_14 : f32 to vector<8x32xf32>
    %26 = arith.mulf %25, %24 : vector<8x32xf32>
    %27 = math.tanh %26 : vector<8x32xf32>
    %cst_15 = arith.constant 5.000000e-01 : f32
    %28 = vector.broadcast %cst_15 : f32 to vector<8x32xf32>
    %29 = arith.mulf %28, %27 : vector<8x32xf32>
    %cst_16 = arith.constant 5.000000e-01 : f32
    %30 = vector.broadcast %cst_16 : f32 to vector<8x32xf32>
    %31 = arith.addf %29, %30 : vector<8x32xf32>
    %32 = arith.addf %19, %22 : vector<8x32xf32>
    %cst_17 = arith.constant 5.000000e-01 : f32
    %33 = vector.broadcast %cst_17 : f32 to vector<8x32xf32>
    %34 = arith.mulf %33, %32 : vector<8x32xf32>
    %35 = math.tanh %34 : vector<8x32xf32>
    %cst_18 = arith.constant 5.000000e-01 : f32
    %36 = vector.broadcast %cst_18 : f32 to vector<8x32xf32>
    %37 = arith.mulf %36, %35 : vector<8x32xf32>
    %cst_19 = arith.constant 5.000000e-01 : f32
    %38 = vector.broadcast %cst_19 : f32 to vector<8x32xf32>
    %39 = arith.addf %37, %38 : vector<8x32xf32>
    %40 = arith.addf %23, %10 : vector<8x32xf32>
    %41 = arith.mulf %31, %40 : vector<8x32xf32>
    %42 = arith.addf %20, %41 : vector<8x32xf32>
    %43 = math.tanh %42 : vector<8x32xf32>
    %cst_20 = arith.constant 1.000000e+00 : f32
    %44 = vector.broadcast %cst_20 : f32 to vector<8x32xf32>
    %45 = arith.subf %44, %39 : vector<8x32xf32>
    %46 = arith.mulf %45, %43 : vector<8x32xf32>
    %47 = arith.mulf %39, %11 : vector<8x32xf32>
    %48 = arith.addf %46, %47 : vector<8x32xf32>
    %c1_i32 = arith.constant 1 : i32
    %c8_i32_21 = arith.constant 8 : i32
    %49 = arith.muli %c1_i32, %c8_i32_21 : i32
    %50 = tpu.assume_multiple %49, 8 : i32
    %51 = arith.index_cast %50 : i32 to index
    %c0_22 = arith.constant 0 : index
    %52 = vector.load %arg8[%51, %c0_22] : memref<64x128xf32, #tpu.memory_space<vmem>>, vector<8x128xf32>
    %53 = arith.truncf %48 : vector<8x32xf32> to vector<8x32xbf16>
    %cst_23 = arith.constant dense<0.000000e+00> : vector<8x128xf32>
    %54 = tpu.matmul %53, %7, %cst_23 {dimension_numbers = #tpu.dot_dimension_numbers<[1], [0], [0], [1], [0, 0, 1, 1], [], []>} : vector<8x32xbf16>, vector<32x128xbf16>, vector<8x128xf32> -> vector<8x128xf32>
    %55 = vector.extract_strided_slice %52 {offsets = [0, 0], sizes = [8, 32], strides = [1, 1]} : vector<8x128xf32> to vector<8x32xf32>
    %56 = vector.extract_strided_slice %52 {offsets = [0, 32], sizes = [8, 32], strides = [1, 1]} : vector<8x128xf32> to vector<8x32xf32>
    %57 = vector.extract_strided_slice %52 {offsets = [0, 64], sizes = [8, 32], strides = [1, 1]} : vector<8x128xf32> to vector<8x32xf32>
    %58 = vector.extract_strided_slice %54 {offsets = [0, 0], sizes = [8, 32], strides = [1, 1]} : vector<8x128xf32> to vector<8x32xf32>
    %59 = vector.extract_strided_slice %54 {offsets = [0, 32], sizes = [8, 32], strides = [1, 1]} : vector<8x128xf32> to vector<8x32xf32>
    %60 = vector.extract_strided_slice %54 {offsets = [0, 64], sizes = [8, 32], strides = [1, 1]} : vector<8x128xf32> to vector<8x32xf32>
    %61 = arith.addf %55, %58 : vector<8x32xf32>
    %cst_24 = arith.constant 5.000000e-01 : f32
    %62 = vector.broadcast %cst_24 : f32 to vector<8x32xf32>
    %63 = arith.mulf %62, %61 : vector<8x32xf32>
    %64 = math.tanh %63 : vector<8x32xf32>
    %cst_25 = arith.constant 5.000000e-01 : f32
    %65 = vector.broadcast %cst_25 : f32 to vector<8x32xf32>
    %66 = arith.mulf %65, %64 : vector<8x32xf32>
    %cst_26 = arith.constant 5.000000e-01 : f32
    %67 = vector.broadcast %cst_26 : f32 to vector<8x32xf32>
    %68 = arith.addf %66, %67 : vector<8x32xf32>
    %69 = arith.addf %56, %59 : vector<8x32xf32>
    %cst_27 = arith.constant 5.000000e-01 : f32
    %70 = vector.broadcast %cst_27 : f32 to vector<8x32xf32>
    %71 = arith.mulf %70, %69 : vector<8x32xf32>
    %72 = math.tanh %71 : vector<8x32xf32>
    %cst_28 = arith.constant 5.000000e-01 : f32
    %73 = vector.broadcast %cst_28 : f32 to vector<8x32xf32>
    %74 = arith.mulf %73, %72 : vector<8x32xf32>
    %cst_29 = arith.constant 5.000000e-01 : f32
    %75 = vector.broadcast %cst_29 : f32 to vector<8x32xf32>
    %76 = arith.addf %74, %75 : vector<8x32xf32>
    %77 = arith.addf %60, %10 : vector<8x32xf32>
    %78 = arith.mulf %68, %77 : vector<8x32xf32>
    %79 = arith.addf %57, %78 : vector<8x32xf32>
    %80 = math.tanh %79 : vector<8x32xf32>
    %cst_30 = arith.constant 1.000000e+00 : f32
    %81 = vector.broadcast %cst_30 : f32 to vector<8x32xf32>
    %82 = arith.subf %81, %76 : vector<8x32xf32>
    %83 = arith.mulf %82, %80 : vector<8x32xf32>
    %84 = arith.mulf %76, %48 : vector<8x32xf32>
    %85 = arith.addf %83, %84 : vector<8x32xf32>
    %c2_i32 = arith.constant 2 : i32
    %c8_i32_31 = arith.constant 8 : i32
    %86 = arith.muli %c2_i32, %c8_i32_31 : i32
    %87 = tpu.assume_multiple %86, 8 : i32
    %88 = arith.index_cast %87 : i32 to index
    %c0_32 = arith.constant 0 : index
    %89 = vector.load %arg8[%88, %c0_32] : memref<64x128xf32, #tpu.memory_space<vmem>>, vector<8x128xf32>
    %90 = arith.truncf %85 : vector<8x32xf32> to vector<8x32xbf16>
    %cst_33 = arith.constant dense<0.000000e+00> : vector<8x128xf32>
    %91 = tpu.matmul %90, %7, %cst_33 {dimension_numbers = #tpu.dot_dimension_numbers<[1], [0], [0], [1], [0, 0, 1, 1], [], []>} : vector<8x32xbf16>, vector<32x128xbf16>, vector<8x128xf32> -> vector<8x128xf32>
    %92 = vector.extract_strided_slice %89 {offsets = [0, 0], sizes = [8, 32], strides = [1, 1]} : vector<8x128xf32> to vector<8x32xf32>
    %93 = vector.extract_strided_slice %89 {offsets = [0, 32], sizes = [8, 32], strides = [1, 1]} : vector<8x128xf32> to vector<8x32xf32>
    %94 = vector.extract_strided_slice %89 {offsets = [0, 64], sizes = [8, 32], strides = [1, 1]} : vector<8x128xf32> to vector<8x32xf32>
    %95 = vector.extract_strided_slice %91 {offsets = [0, 0], sizes = [8, 32], strides = [1, 1]} : vector<8x128xf32> to vector<8x32xf32>
    %96 = vector.extract_strided_slice %91 {offsets = [0, 32], sizes = [8, 32], strides = [1, 1]} : vector<8x128xf32> to vector<8x32xf32>
    %97 = vector.extract_strided_slice %91 {offsets = [0, 64], sizes = [8, 32], strides = [1, 1]} : vector<8x128xf32> to vector<8x32xf32>
    %98 = arith.addf %92, %95 : vector<8x32xf32>
    %cst_34 = arith.constant 5.000000e-01 : f32
    %99 = vector.broadcast %cst_34 : f32 to vector<8x32xf32>
    %100 = arith.mulf %99, %98 : vector<8x32xf32>
    %101 = math.tanh %100 : vector<8x32xf32>
    %cst_35 = arith.constant 5.000000e-01 : f32
    %102 = vector.broadcast %cst_35 : f32 to vector<8x32xf32>
    %103 = arith.mulf %102, %101 : vector<8x32xf32>
    %cst_36 = arith.constant 5.000000e-01 : f32
    %104 = vector.broadcast %cst_36 : f32 to vector<8x32xf32>
    %105 = arith.addf %103, %104 : vector<8x32xf32>
    %106 = arith.addf %93, %96 : vector<8x32xf32>
    %cst_37 = arith.constant 5.000000e-01 : f32
    %107 = vector.broadcast %cst_37 : f32 to vector<8x32xf32>
    %108 = arith.mulf %107, %106 : vector<8x32xf32>
    %109 = math.tanh %108 : vector<8x32xf32>
    %cst_38 = arith.constant 5.000000e-01 : f32
    %110 = vector.broadcast %cst_38 : f32 to vector<8x32xf32>
    %111 = arith.mulf %110, %109 : vector<8x32xf32>
    %cst_39 = arith.constant 5.000000e-01 : f32
    %112 = vector.broadcast %cst_39 : f32 to vector<8x32xf32>
    %113 = arith.addf %111, %112 : vector<8x32xf32>
    %114 = arith.addf %97, %10 : vector<8x32xf32>
    %115 = arith.mulf %105, %114 : vector<8x32xf32>
    %116 = arith.addf %94, %115 : vector<8x32xf32>
    %117 = math.tanh %116 : vector<8x32xf32>
    %cst_40 = arith.constant 1.000000e+00 : f32
    %118 = vector.broadcast %cst_40 : f32 to vector<8x32xf32>
    %119 = arith.subf %118, %113 : vector<8x32xf32>
    %120 = arith.mulf %119, %117 : vector<8x32xf32>
    %121 = arith.mulf %113, %85 : vector<8x32xf32>
    %122 = arith.addf %120, %121 : vector<8x32xf32>
    %c3_i32 = arith.constant 3 : i32
    %c8_i32_41 = arith.constant 8 : i32
    %123 = arith.muli %c3_i32, %c8_i32_41 : i32
    %124 = tpu.assume_multiple %123, 8 : i32
    %125 = arith.index_cast %124 : i32 to index
    %c0_42 = arith.constant 0 : index
    %126 = vector.load %arg8[%125, %c0_42] : memref<64x128xf32, #tpu.memory_space<vmem>>, vector<8x128xf32>
    %127 = arith.truncf %122 : vector<8x32xf32> to vector<8x32xbf16>
    %cst_43 = arith.constant dense<0.000000e+00> : vector<8x128xf32>
    %128 = tpu.matmul %127, %7, %cst_43 {dimension_numbers = #tpu.dot_dimension_numbers<[1], [0], [0], [1], [0, 0, 1, 1], [], []>} : vector<8x32xbf16>, vector<32x128xbf16>, vector<8x128xf32> -> vector<8x128xf32>
    %129 = vector.extract_strided_slice %126 {offsets = [0, 0], sizes = [8, 32], strides = [1, 1]} : vector<8x128xf32> to vector<8x32xf32>
    %130 = vector.extract_strided_slice %126 {offsets = [0, 32], sizes = [8, 32], strides = [1, 1]} : vector<8x128xf32> to vector<8x32xf32>
    %131 = vector.extract_strided_slice %126 {offsets = [0, 64], sizes = [8, 32], strides = [1, 1]} : vector<8x128xf32> to vector<8x32xf32>
    %132 = vector.extract_strided_slice %128 {offsets = [0, 0], sizes = [8, 32], strides = [1, 1]} : vector<8x128xf32> to vector<8x32xf32>
    %133 = vector.extract_strided_slice %128 {offsets = [0, 32], sizes = [8, 32], strides = [1, 1]} : vector<8x128xf32> to vector<8x32xf32>
    %134 = vector.extract_strided_slice %128 {offsets = [0, 64], sizes = [8, 32], strides = [1, 1]} : vector<8x128xf32> to vector<8x32xf32>
    %135 = arith.addf %129, %132 : vector<8x32xf32>
    %cst_44 = arith.constant 5.000000e-01 : f32
    %136 = vector.broadcast %cst_44 : f32 to vector<8x32xf32>
    %137 = arith.mulf %136, %135 : vector<8x32xf32>
    %138 = math.tanh %137 : vector<8x32xf32>
    %cst_45 = arith.constant 5.000000e-01 : f32
    %139 = vector.broadcast %cst_45 : f32 to vector<8x32xf32>
    %140 = arith.mulf %139, %138 : vector<8x32xf32>
    %cst_46 = arith.constant 5.000000e-01 : f32
    %141 = vector.broadcast %cst_46 : f32 to vector<8x32xf32>
    %142 = arith.addf %140, %141 : vector<8x32xf32>
    %143 = arith.addf %130, %133 : vector<8x32xf32>
    %cst_47 = arith.constant 5.000000e-01 : f32
    %144 = vector.broadcast %cst_47 : f32 to vector<8x32xf32>
    %145 = arith.mulf %144, %143 : vector<8x32xf32>
    %146 = math.tanh %145 : vector<8x32xf32>
    %cst_48 = arith.constant 5.000000e-01 : f32
    %147 = vector.broadcast %cst_48 : f32 to vector<8x32xf32>
    %148 = arith.mulf %147, %146 : vector<8x32xf32>
    %cst_49 = arith.constant 5.000000e-01 : f32
    %149 = vector.broadcast %cst_49 : f32 to vector<8x32xf32>
    %150 = arith.addf %148, %149 : vector<8x32xf32>
    %151 = arith.addf %134, %10 : vector<8x32xf32>
    %152 = arith.mulf %142, %151 : vector<8x32xf32>
    %153 = arith.addf %131, %152 : vector<8x32xf32>
    %154 = math.tanh %153 : vector<8x32xf32>
    %cst_50 = arith.constant 1.000000e+00 : f32
    %155 = vector.broadcast %cst_50 : f32 to vector<8x32xf32>
    %156 = arith.subf %155, %150 : vector<8x32xf32>
    %157 = arith.mulf %156, %154 : vector<8x32xf32>
    %158 = arith.mulf %150, %122 : vector<8x32xf32>
    %159 = arith.addf %157, %158 : vector<8x32xf32>
    %c4_i32 = arith.constant 4 : i32
    %c8_i32_51 = arith.constant 8 : i32
    %160 = arith.muli %c4_i32, %c8_i32_51 : i32
    %161 = tpu.assume_multiple %160, 8 : i32
    %162 = arith.index_cast %161 : i32 to index
    %c0_52 = arith.constant 0 : index
    %163 = vector.load %arg8[%162, %c0_52] : memref<64x128xf32, #tpu.memory_space<vmem>>, vector<8x128xf32>
    %164 = arith.truncf %159 : vector<8x32xf32> to vector<8x32xbf16>
    %cst_53 = arith.constant dense<0.000000e+00> : vector<8x128xf32>
    %165 = tpu.matmul %164, %7, %cst_53 {dimension_numbers = #tpu.dot_dimension_numbers<[1], [0], [0], [1], [0, 0, 1, 1], [], []>} : vector<8x32xbf16>, vector<32x128xbf16>, vector<8x128xf32> -> vector<8x128xf32>
    %166 = vector.extract_strided_slice %163 {offsets = [0, 0], sizes = [8, 32], strides = [1, 1]} : vector<8x128xf32> to vector<8x32xf32>
    %167 = vector.extract_strided_slice %163 {offsets = [0, 32], sizes = [8, 32], strides = [1, 1]} : vector<8x128xf32> to vector<8x32xf32>
    %168 = vector.extract_strided_slice %163 {offsets = [0, 64], sizes = [8, 32], strides = [1, 1]} : vector<8x128xf32> to vector<8x32xf32>
    %169 = vector.extract_strided_slice %165 {offsets = [0, 0], sizes = [8, 32], strides = [1, 1]} : vector<8x128xf32> to vector<8x32xf32>
    %170 = vector.extract_strided_slice %165 {offsets = [0, 32], sizes = [8, 32], strides = [1, 1]} : vector<8x128xf32> to vector<8x32xf32>
    %171 = vector.extract_strided_slice %165 {offsets = [0, 64], sizes = [8, 32], strides = [1, 1]} : vector<8x128xf32> to vector<8x32xf32>
    %172 = arith.addf %166, %169 : vector<8x32xf32>
    %cst_54 = arith.constant 5.000000e-01 : f32
    %173 = vector.broadcast %cst_54 : f32 to vector<8x32xf32>
    %174 = arith.mulf %173, %172 : vector<8x32xf32>
    %175 = math.tanh %174 : vector<8x32xf32>
    %cst_55 = arith.constant 5.000000e-01 : f32
    %176 = vector.broadcast %cst_55 : f32 to vector<8x32xf32>
    %177 = arith.mulf %176, %175 : vector<8x32xf32>
    %cst_56 = arith.constant 5.000000e-01 : f32
    %178 = vector.broadcast %cst_56 : f32 to vector<8x32xf32>
    %179 = arith.addf %177, %178 : vector<8x32xf32>
    %180 = arith.addf %167, %170 : vector<8x32xf32>
    %cst_57 = arith.constant 5.000000e-01 : f32
    %181 = vector.broadcast %cst_57 : f32 to vector<8x32xf32>
    %182 = arith.mulf %181, %180 : vector<8x32xf32>
    %183 = math.tanh %182 : vector<8x32xf32>
    %cst_58 = arith.constant 5.000000e-01 : f32
    %184 = vector.broadcast %cst_58 : f32 to vector<8x32xf32>
    %185 = arith.mulf %184, %183 : vector<8x32xf32>
    %cst_59 = arith.constant 5.000000e-01 : f32
    %186 = vector.broadcast %cst_59 : f32 to vector<8x32xf32>
    %187 = arith.addf %185, %186 : vector<8x32xf32>
    %188 = arith.addf %171, %10 : vector<8x32xf32>
    %189 = arith.mulf %179, %188 : vector<8x32xf32>
    %190 = arith.addf %168, %189 : vector<8x32xf32>
    %191 = math.tanh %190 : vector<8x32xf32>
    %cst_60 = arith.constant 1.000000e+00 : f32
    %192 = vector.broadcast %cst_60 : f32 to vector<8x32xf32>
    %193 = arith.subf %192, %187 : vector<8x32xf32>
    %194 = arith.mulf %193, %191 : vector<8x32xf32>
    %195 = arith.mulf %187, %159 : vector<8x32xf32>
    %196 = arith.addf %194, %195 : vector<8x32xf32>
    %c5_i32 = arith.constant 5 : i32
    %c8_i32_61 = arith.constant 8 : i32
    %197 = arith.muli %c5_i32, %c8_i32_61 : i32
    %198 = tpu.assume_multiple %197, 8 : i32
    %199 = arith.index_cast %198 : i32 to index
    %c0_62 = arith.constant 0 : index
    %200 = vector.load %arg8[%199, %c0_62] : memref<64x128xf32, #tpu.memory_space<vmem>>, vector<8x128xf32>
    %201 = arith.truncf %196 : vector<8x32xf32> to vector<8x32xbf16>
    %cst_63 = arith.constant dense<0.000000e+00> : vector<8x128xf32>
    %202 = tpu.matmul %201, %7, %cst_63 {dimension_numbers = #tpu.dot_dimension_numbers<[1], [0], [0], [1], [0, 0, 1, 1], [], []>} : vector<8x32xbf16>, vector<32x128xbf16>, vector<8x128xf32> -> vector<8x128xf32>
    %203 = vector.extract_strided_slice %200 {offsets = [0, 0], sizes = [8, 32], strides = [1, 1]} : vector<8x128xf32> to vector<8x32xf32>
    %204 = vector.extract_strided_slice %200 {offsets = [0, 32], sizes = [8, 32], strides = [1, 1]} : vector<8x128xf32> to vector<8x32xf32>
    %205 = vector.extract_strided_slice %200 {offsets = [0, 64], sizes = [8, 32], strides = [1, 1]} : vector<8x128xf32> to vector<8x32xf32>
    %206 = vector.extract_strided_slice %202 {offsets = [0, 0], sizes = [8, 32], strides = [1, 1]} : vector<8x128xf32> to vector<8x32xf32>
    %207 = vector.extract_strided_slice %202 {offsets = [0, 32], sizes = [8, 32], strides = [1, 1]} : vector<8x128xf32> to vector<8x32xf32>
    %208 = vector.extract_strided_slice %202 {offsets = [0, 64], sizes = [8, 32], strides = [1, 1]} : vector<8x128xf32> to vector<8x32xf32>
    %209 = arith.addf %203, %206 : vector<8x32xf32>
    %cst_64 = arith.constant 5.000000e-01 : f32
    %210 = vector.broadcast %cst_64 : f32 to vector<8x32xf32>
    %211 = arith.mulf %210, %209 : vector<8x32xf32>
    %212 = math.tanh %211 : vector<8x32xf32>
    %cst_65 = arith.constant 5.000000e-01 : f32
    %213 = vector.broadcast %cst_65 : f32 to vector<8x32xf32>
    %214 = arith.mulf %213, %212 : vector<8x32xf32>
    %cst_66 = arith.constant 5.000000e-01 : f32
    %215 = vector.broadcast %cst_66 : f32 to vector<8x32xf32>
    %216 = arith.addf %214, %215 : vector<8x32xf32>
    %217 = arith.addf %204, %207 : vector<8x32xf32>
    %cst_67 = arith.constant 5.000000e-01 : f32
    %218 = vector.broadcast %cst_67 : f32 to vector<8x32xf32>
    %219 = arith.mulf %218, %217 : vector<8x32xf32>
    %220 = math.tanh %219 : vector<8x32xf32>
    %cst_68 = arith.constant 5.000000e-01 : f32
    %221 = vector.broadcast %cst_68 : f32 to vector<8x32xf32>
    %222 = arith.mulf %221, %220 : vector<8x32xf32>
    %cst_69 = arith.constant 5.000000e-01 : f32
    %223 = vector.broadcast %cst_69 : f32 to vector<8x32xf32>
    %224 = arith.addf %222, %223 : vector<8x32xf32>
    %225 = arith.addf %208, %10 : vector<8x32xf32>
    %226 = arith.mulf %216, %225 : vector<8x32xf32>
    %227 = arith.addf %205, %226 : vector<8x32xf32>
    %228 = math.tanh %227 : vector<8x32xf32>
    %cst_70 = arith.constant 1.000000e+00 : f32
    %229 = vector.broadcast %cst_70 : f32 to vector<8x32xf32>
    %230 = arith.subf %229, %224 : vector<8x32xf32>
    %231 = arith.mulf %230, %228 : vector<8x32xf32>
    %232 = arith.mulf %224, %196 : vector<8x32xf32>
    %233 = arith.addf %231, %232 : vector<8x32xf32>
    %c6_i32 = arith.constant 6 : i32
    %c8_i32_71 = arith.constant 8 : i32
    %234 = arith.muli %c6_i32, %c8_i32_71 : i32
    %235 = tpu.assume_multiple %234, 8 : i32
    %236 = arith.index_cast %235 : i32 to index
    %c0_72 = arith.constant 0 : index
    %237 = vector.load %arg8[%236, %c0_72] : memref<64x128xf32, #tpu.memory_space<vmem>>, vector<8x128xf32>
    %238 = arith.truncf %233 : vector<8x32xf32> to vector<8x32xbf16>
    %cst_73 = arith.constant dense<0.000000e+00> : vector<8x128xf32>
    %239 = tpu.matmul %238, %7, %cst_73 {dimension_numbers = #tpu.dot_dimension_numbers<[1], [0], [0], [1], [0, 0, 1, 1], [], []>} : vector<8x32xbf16>, vector<32x128xbf16>, vector<8x128xf32> -> vector<8x128xf32>
    %240 = vector.extract_strided_slice %237 {offsets = [0, 0], sizes = [8, 32], strides = [1, 1]} : vector<8x128xf32> to vector<8x32xf32>
    %241 = vector.extract_strided_slice %237 {offsets = [0, 32], sizes = [8, 32], strides = [1, 1]} : vector<8x128xf32> to vector<8x32xf32>
    %242 = vector.extract_strided_slice %237 {offsets = [0, 64], sizes = [8, 32], strides = [1, 1]} : vector<8x128xf32> to vector<8x32xf32>
    %243 = vector.extract_strided_slice %239 {offsets = [0, 0], sizes = [8, 32], strides = [1, 1]} : vector<8x128xf32> to vector<8x32xf32>
    %244 = vector.extract_strided_slice %239 {offsets = [0, 32], sizes = [8, 32], strides = [1, 1]} : vector<8x128xf32> to vector<8x32xf32>
    %245 = vector.extract_strided_slice %239 {offsets = [0, 64], sizes = [8, 32], strides = [1, 1]} : vector<8x128xf32> to vector<8x32xf32>
    %246 = arith.addf %240, %243 : vector<8x32xf32>
    %cst_74 = arith.constant 5.000000e-01 : f32
    %247 = vector.broadcast %cst_74 : f32 to vector<8x32xf32>
    %248 = arith.mulf %247, %246 : vector<8x32xf32>
    %249 = math.tanh %248 : vector<8x32xf32>
    %cst_75 = arith.constant 5.000000e-01 : f32
    %250 = vector.broadcast %cst_75 : f32 to vector<8x32xf32>
    %251 = arith.mulf %250, %249 : vector<8x32xf32>
    %cst_76 = arith.constant 5.000000e-01 : f32
    %252 = vector.broadcast %cst_76 : f32 to vector<8x32xf32>
    %253 = arith.addf %251, %252 : vector<8x32xf32>
    %254 = arith.addf %241, %244 : vector<8x32xf32>
    %cst_77 = arith.constant 5.000000e-01 : f32
    %255 = vector.broadcast %cst_77 : f32 to vector<8x32xf32>
    %256 = arith.mulf %255, %254 : vector<8x32xf32>
    %257 = math.tanh %256 : vector<8x32xf32>
    %cst_78 = arith.constant 5.000000e-01 : f32
    %258 = vector.broadcast %cst_78 : f32 to vector<8x32xf32>
    %259 = arith.mulf %258, %257 : vector<8x32xf32>
    %cst_79 = arith.constant 5.000000e-01 : f32
    %260 = vector.broadcast %cst_79 : f32 to vector<8x32xf32>
    %261 = arith.addf %259, %260 : vector<8x32xf32>
    %262 = arith.addf %245, %10 : vector<8x32xf32>
    %263 = arith.mulf %253, %262 : vector<8x32xf32>
    %264 = arith.addf %242, %263 : vector<8x32xf32>
    %265 = math.tanh %264 : vector<8x32xf32>
    %cst_80 = arith.constant 1.000000e+00 : f32
    %266 = vector.broadcast %cst_80 : f32 to vector<8x32xf32>
    %267 = arith.subf %266, %261 : vector<8x32xf32>
    %268 = arith.mulf %267, %265 : vector<8x32xf32>
    %269 = arith.mulf %261, %233 : vector<8x32xf32>
    %270 = arith.addf %268, %269 : vector<8x32xf32>
    %c7_i32 = arith.constant 7 : i32
    %c8_i32_81 = arith.constant 8 : i32
    %271 = arith.muli %c7_i32, %c8_i32_81 : i32
    %272 = tpu.assume_multiple %271, 8 : i32
    %273 = arith.index_cast %272 : i32 to index
    %c0_82 = arith.constant 0 : index
    %274 = vector.load %arg8[%273, %c0_82] : memref<64x128xf32, #tpu.memory_space<vmem>>, vector<8x128xf32>
    %275 = arith.truncf %270 : vector<8x32xf32> to vector<8x32xbf16>
    %cst_83 = arith.constant dense<0.000000e+00> : vector<8x128xf32>
    %276 = tpu.matmul %275, %7, %cst_83 {dimension_numbers = #tpu.dot_dimension_numbers<[1], [0], [0], [1], [0, 0, 1, 1], [], []>} : vector<8x32xbf16>, vector<32x128xbf16>, vector<8x128xf32> -> vector<8x128xf32>
    %277 = vector.extract_strided_slice %274 {offsets = [0, 0], sizes = [8, 32], strides = [1, 1]} : vector<8x128xf32> to vector<8x32xf32>
    %278 = vector.extract_strided_slice %274 {offsets = [0, 32], sizes = [8, 32], strides = [1, 1]} : vector<8x128xf32> to vector<8x32xf32>
    %279 = vector.extract_strided_slice %274 {offsets = [0, 64], sizes = [8, 32], strides = [1, 1]} : vector<8x128xf32> to vector<8x32xf32>
    %280 = vector.extract_strided_slice %276 {offsets = [0, 0], sizes = [8, 32], strides = [1, 1]} : vector<8x128xf32> to vector<8x32xf32>
    %281 = vector.extract_strided_slice %276 {offsets = [0, 32], sizes = [8, 32], strides = [1, 1]} : vector<8x128xf32> to vector<8x32xf32>
    %282 = vector.extract_strided_slice %276 {offsets = [0, 64], sizes = [8, 32], strides = [1, 1]} : vector<8x128xf32> to vector<8x32xf32>
    %283 = arith.addf %277, %280 : vector<8x32xf32>
    %cst_84 = arith.constant 5.000000e-01 : f32
    %284 = vector.broadcast %cst_84 : f32 to vector<8x32xf32>
    %285 = arith.mulf %284, %283 : vector<8x32xf32>
    %286 = math.tanh %285 : vector<8x32xf32>
    %cst_85 = arith.constant 5.000000e-01 : f32
    %287 = vector.broadcast %cst_85 : f32 to vector<8x32xf32>
    %288 = arith.mulf %287, %286 : vector<8x32xf32>
    %cst_86 = arith.constant 5.000000e-01 : f32
    %289 = vector.broadcast %cst_86 : f32 to vector<8x32xf32>
    %290 = arith.addf %288, %289 : vector<8x32xf32>
    %291 = arith.addf %278, %281 : vector<8x32xf32>
    %cst_87 = arith.constant 5.000000e-01 : f32
    %292 = vector.broadcast %cst_87 : f32 to vector<8x32xf32>
    %293 = arith.mulf %292, %291 : vector<8x32xf32>
    %294 = math.tanh %293 : vector<8x32xf32>
    %cst_88 = arith.constant 5.000000e-01 : f32
    %295 = vector.broadcast %cst_88 : f32 to vector<8x32xf32>
    %296 = arith.mulf %295, %294 : vector<8x32xf32>
    %cst_89 = arith.constant 5.000000e-01 : f32
    %297 = vector.broadcast %cst_89 : f32 to vector<8x32xf32>
    %298 = arith.addf %296, %297 : vector<8x32xf32>
    %299 = arith.addf %282, %10 : vector<8x32xf32>
    %300 = arith.mulf %290, %299 : vector<8x32xf32>
    %301 = arith.addf %279, %300 : vector<8x32xf32>
    %302 = math.tanh %301 : vector<8x32xf32>
    %cst_90 = arith.constant 1.000000e+00 : f32
    %303 = vector.broadcast %cst_90 : f32 to vector<8x32xf32>
    %304 = arith.subf %303, %298 : vector<8x32xf32>
    %305 = arith.mulf %304, %302 : vector<8x32xf32>
    %306 = arith.mulf %298, %270 : vector<8x32xf32>
    %307 = arith.addf %305, %306 : vector<8x32xf32>
    %c8_i32_91 = arith.constant 8 : i32
    %308 = arith.truncf %307 : vector<8x32xf32> to vector<8x32xbf16>
    %c0_92 = arith.constant 0 : index
    %c0_93 = arith.constant 0 : index
    %309 = vector.load %arg5[%c0_92, %c0_93] : memref<32x128xbf16, #tpu.memory_space<vmem>>, vector<32x128xbf16>
    %cst_94 = arith.constant dense<0.000000e+00> : vector<8x128xf32>
    %310 = tpu.matmul %308, %309, %cst_94 {dimension_numbers = #tpu.dot_dimension_numbers<[1], [0], [0], [1], [0, 0, 1, 1], [], []>} : vector<8x32xbf16>, vector<32x128xbf16>, vector<8x128xf32> -> vector<8x128xf32>
    %c0_95 = arith.constant 0 : index
    %c0_96 = arith.constant 0 : index
    %311 = vector.load %arg6[%c0_95, %c0_96] : memref<1x128xf32, #tpu.memory_space<vmem>>, vector<1x128xf32>
    %312 = vector.broadcast %311 : vector<1x128xf32> to vector<8x128xf32>
    %313 = arith.addf %310, %312 : vector<8x128xf32>
    %c0_97 = arith.constant 0 : index
    %c0_98 = arith.constant 0 : index
    %314 = vector.load %arg7[%c0_97, %c0_98] : memref<8x128xf32, #tpu.memory_space<vmem>>, vector<8x128xf32>
    tpu.vector_store %arg7[%c0_97, %c0_98], %313 {strides = array<i32>} : memref<8x128xf32, #tpu.memory_space<vmem>>, vector<8x128xf32>,
    return
  }
}

</mosaic_0001>

<llo_original>
// kernel: rnn_regressor_forward.1
$region0: #{rnn_regressor_forward.1}
  #allocation0 [shape = 'u32[]', space=smem, size = 0x4, offset = 0x4, fixed_abs, tag = 'smem constant byte address 0x4 - core index']
  #allocation1 [shape = 'u32[72,128]{1,0:T(1,128)}', space=vmem, size = 0x9000, scoped, tag = 'internal scratch']
  #allocation2 [shape = 'f32[64,128]{1,0:T(8,128)}', space=vmem, size = 0x8000, scoped, tag = 'scratch operand']
  %s0 = inlined_call_operand.vmem [shape: bf16[64,16], index: 0, kind: input, shape index: {}]
  %s1 = inlined_call_operand.vmem [shape: bf16[16,128], index: 1, kind: input, shape index: {}]
  %s2 = inlined_call_operand.vmem [shape: bf16[32,128], index: 2, kind: input, shape index: {}]
  %s3 = inlined_call_operand.vmem [shape: f32[1,128], index: 3, kind: input, shape index: {}]
  %s4 = inlined_call_operand.vmem [shape: f32[1,32], index: 4, kind: input, shape index: {}]
  %s5 = inlined_call_operand.vmem [shape: bf16[32,128], index: 5, kind: input, shape index: {}]
  %s6 = inlined_call_operand.vmem [shape: f32[1,128], index: 6, kind: input, shape index: {}]
  %s7 = inlined_call_operand.vmem [shape: f32[8,128], index: 7, kind: output, shape index: {}]
  %s8 = sld [smem:[#allocation0]]
  $region38: #{rnn_regressor_forward.1} parent=0
    _
  %s10 = ssub.s32 1, %s8
  %s11 = scalar_select 0, %s10, %s8
  // Predicated region
  $region2: #{rnn_regressor_forward.1} parent=0 // pred_check
    _
  $region3: #{rnn_regressor_forward.1} parent=0 // pred_check_branch
    %13 = sbr.rel (0) target = $region5
  $region4: #{rnn_regressor_forward.1} parent=0 // pred_region
    _
  $region5: #{rnn_regressor_forward.1} parent=0 // pred_fallthru
    _
  // Predicated region
  $region6: #{rnn_regressor_forward.1} parent=0 // pred_check
    _
  $region7: #{rnn_regressor_forward.1} parent=0 // pred_check_branch
    %15 = sbr.rel (0) target = $region9
  $region8: #{rnn_regressor_forward.1} parent=0 // pred_region
    _
  $region9: #{rnn_regressor_forward.1} parent=0 // pred_fallthru
    _
  // Predicated region
  $region10: #{rnn_regressor_forward.1} parent=0 // pred_check
    _
  $region11: #{rnn_regressor_forward.1} parent=0 // pred_check_branch
    %17 = sbr.rel (0) target = $region13
  $region12: #{rnn_regressor_forward.1} parent=0 // pred_region
    _
  $region13: #{rnn_regressor_forward.1} parent=0 // pred_fallthru
    _
  // Predicated region
  $region14: #{rnn_regressor_forward.1} parent=0 // pred_check
    _
  $region15: #{rnn_regressor_forward.1} parent=0 // pred_check_branch
    %19 = sbr.rel (0) target = $region17
  $region16: #{rnn_regressor_forward.1} parent=0 // pred_region
    _
  $region17: #{rnn_regressor_forward.1} parent=0 // pred_fallthru
    _
  // Predicated region
  $region18: #{rnn_regressor_forward.1} parent=0 // pred_check
    _
  $region19: #{rnn_regressor_forward.1} parent=0 // pred_check_branch
    %21 = sbr.rel (0) target = $region21
  $region20: #{rnn_regressor_forward.1} parent=0 // pred_region
    _
  $region21: #{rnn_regressor_forward.1} parent=0 // pred_fallthru
    _
  // Predicated region
  $region22: #{rnn_regressor_forward.1} parent=0 // pred_check
    _
  $region23: #{rnn_regressor_forward.1} parent=0 // pred_check_branch
    %23 = sbr.rel (0) target = $region25
  $region24: #{rnn_regressor_forward.1} parent=0 // pred_region
    _
  $region25: #{rnn_regressor_forward.1} parent=0 // pred_fallthru
    _
  // Predicated region
  $region26: #{rnn_regressor_forward.1} parent=0 // pred_check
    _
  $region27: #{rnn_regressor_forward.1} parent=0 // pred_check_branch
    %25 = sbr.rel (0) target = $region29
  $region28: #{rnn_regressor_forward.1} parent=0 // pred_region
    _
  $region29: #{rnn_regressor_forward.1} parent=0 // pred_fallthru
    _
  %v27 = vld [vmem:[%s0] sm:$0xf]
  %v28 = vld [vmem:[%s0 + $0x4] sm:$0xf]
  %v29 = vld [vmem:[%s0 + $0x8] sm:$0xf]
  %v30 = vld [vmem:[%s0 + $0xc] sm:$0xf]
  %v31 = vld [vmem:[%s0 + $0x10] sm:$0xf]
  %v32 = vld [vmem:[%s0 + $0x14] sm:$0xf]
  %v33 = vld [vmem:[%s0 + $0x18] sm:$0xf]
  %v34 = vld [vmem:[%s0 + $0x1c] sm:$0xf]
  %v35 = vld [vmem:[%s1] sm:$0xf]
  %v36 = vld [vmem:[%s1 + $0x4] sm:$0xf]
  %v37 = vld [vmem:[%s3] sm:$0x1]
  %v39 = vperm.slane %v37, 0
  %v49 = vunpack.c.l.b16 %v27
  %v50 = vunpack.c.l.b16 %v28
  %v51 = vunpack.c.l.b16 %v29
  %v52 = vunpack.c.l.b16 %v30
  %v53 = vunpack.c.l.b16 %v31
  %v54 = vunpack.c.l.b16 %v32
  %v55 = vunpack.c.l.b16 %v33
  %v56 = vunpack.c.l.b16 %v34
  %v57 = vpack.c.b16 %v50, %v49
  %v58 = vpack.c.b16 %v52, %v51
  %v59 = vpack.c.b16 %v54, %v53
  %v60 = vpack.c.b16 %v56, %v55
  %v63 = vunpack.c.l.b16 %v35
  %v64 = vunpack.c.l.b16 %v36
  %v65 = vpack.c.b16 %v64, %v63
  %vm67 = vcmask 130048
  %v69 = vsel %vm67, %v57, 0
  %v72 = vsel %vm67, %v58, 0
  %v75 = vsel %vm67, %v59, 0
  %v78 = vsel %vm67, %v60, 0
  %80 = vmatpush.bf16.msra.mxu0 0
  %81 = vmatpush.bf16.msra.mxu0 0
  %82 = vmatpush.bf16.msra.mxu0 0
  %83 = vmatpush.bf16.msra.mxu0 0
  %84 = vmatpush.bf16.msra.mxu0 0
  %85 = vmatpush.bf16.msra.mxu0 0
  %86 = vmatpush.bf16.msra.mxu0 0
  %87 = vmatpush.bf16.msra.mxu0 %v65
  %88 = vmatmul.bf16.gmra.mxu0 %v69
  %v89 = vpop.f32.mrf.mxu0
  %v90 = vadd.f32 %v39, %v89
  %v91 = vpop.f32.mrf.mxu0
  %v92 = vadd.f32 %v39, %v91
  %93 = vmatmul.bf16.gmra.mxu0 %v72
  %v94 = vpop.f32.mrf.mxu0
  %v95 = vadd.f32 %v39, %v94
  %v96 = vpop.f32.mrf.mxu0
  %v97 = vadd.f32 %v39, %v96
  %98 = vmatmul.bf16.gmra.mxu0 %v75
  %v99 = vpop.f32.mrf.mxu0
  %v100 = vadd.f32 %v39, %v99
  %v101 = vpop.f32.mrf.mxu0
  %v102 = vadd.f32 %v39, %v101
  %103 = vmatmul.bf16.gmra.mxu0 %v78
  %v104 = vpop.f32.mrf.mxu0
  %v105 = vadd.f32 %v39, %v104
  %v106 = vpop.f32.mrf.mxu0
  %v107 = vadd.f32 %v39, %v106
  %108 = vdwg.mxu0
  %109 = vst [vmem:[#allocation2] sm:$0xff] %v90
  %110 = vst [vmem:[#allocation2 + $0x8] sm:$0xff] %v92
  %111 = vst [vmem:[#allocation2 + $0x10] sm:$0xff] %v95
  %112 = vst [vmem:[#allocation2 + $0x18] sm:$0xff] %v97
  %113 = vst [vmem:[#allocation2 + $0x20] sm:$0xff] %v100
  %114 = vst [vmem:[#allocation2 + $0x28] sm:$0xff] %v102
  %115 = vst [vmem:[#allocation2 + $0x30] sm:$0xff] %v105
  %116 = vst [vmem:[#allocation2 + $0x38] sm:$0xff] %v107
  %v117 = vld [vmem:[%s2] sm:$0xf]
  %v118 = vld [vmem:[%s2 + $0x4] sm:$0xf]
  %v119 = vld [vmem:[%s2 + $0x8] sm:$0xf]
  %v120 = vld [vmem:[%s2 + $0xc] sm:$0xf]
  %v121 = vld [vmem:[%s4] sm:$0x1]
  %v123 = vperm.slane %v121, 0
  %v124 = vld [vmem:[#allocation2] sm:$0xff]
  %v129 = vunpack.c.l.b16 %v117
  %v130 = vunpack.c.l.b16 %v118
  %v131 = vunpack.c.l.b16 %v119
  %v132 = vunpack.c.l.b16 %v120
  %v133 = vpack.c.b16 %v130, %v129
  %v134 = vpack.c.b16 %v132, %v131
  %vm137 = vcmask 261120
  %v139 = vsel %vm137, 0, 0
  %141 = vmatpush.bf16.msra.mxu0 0
  %142 = vmatpush.bf16.msra.mxu0 0
  %143 = vmatpush.bf16.msra.mxu0 0
  %144 = vmatpush.bf16.msra.mxu0 0
  %145 = vmatpush.bf16.msra.mxu0 0
  %146 = vmatpush.bf16.msra.mxu0 0
  %147 = vmatpush.bf16.msra.mxu0 %v134
  %148 = vmatpush.bf16.msra.mxu0 %v133
  %149 = vmatmul.bf16.gmra.mxu0 %v139
  %v150 = vpop.f32.mrf.mxu0
  %v151 = vadd.f32 0.0, %v150
  %v152 = vpop.f32.mrf.mxu0
  %153 = vdwg.mxu0
  %v154 = vadd.f32 %v124, %v151
  %v155 = vmul.f32 %v154, 0.5
  %v156 = vtanh.pop %v155
  %v157 = vmul.f32 %v156, 0.5
  %v158 = vadd.f32 %v157, 0.5
  %159 = vrot.lane.b32.xlu0 %v123, 64
  %v160 = vpop.permute.xlu0 %159
  %v162 = vadd.f32 %v151, %v160
  %164 = vrot.lane.b32.xlu0 %v162, 64
  %v165 = vpop.permute.xlu0 %164
  %v167 = vmul.f32 %v158, %v165
  %169 = vrot.lane.b32.xlu0 %v167, 64
  %v170 = vpop.permute.xlu0 %169
  %v172 = vadd.f32 %v124, %v170
  %v173 = vtanh.pop %v172
  %v174 = vsub.f32 1.0, %v158
  %176 = vrot.lane.b32.xlu0 %v173, 96
  %v177 = vpop.permute.xlu0 %176
  %v179 = vmul.f32 %v174, %v177
  %v180 = vmul.f32 %v158, 0.0
  %v181 = vadd.f32 %v179, %v180
  %s182 = scalar_lea.vmem [#allocation2], 8
  %v183 = vld [vmem:[%s182] sm:$0xff]
  %v184 = vpack.c.bf16 %v181, %v181
  %186 = vrot.lane.b32.xlu0 %v184, 96
  %v187 = vpop.permute.xlu0 %186
  %v189 = vsel %vm137, %v187, 0
  %191 = vmatpush.bf16.msra.mxu0 0
  %192 = vmatpush.bf16.msra.mxu0 0
  %193 = vmatpush.bf16.msra.mxu0 0
  %194 = vmatpush.bf16.msra.mxu0 0
  %195 = vmatpush.bf16.msra.mxu0 0
  %196 = vmatpush.bf16.msra.mxu0 0
  %197 = vmatpush.bf16.msra.mxu0 %v134
  %198 = vmatpush.bf16.msra.mxu0 %v133
  %199 = vmatmul.bf16.gmra.mxu0 %v189
  %v200 = vpop.f32.mrf.mxu0
  %v201 = vadd.f32 0.0, %v200
  %v202 = vpop.f32.mrf.mxu0
  %203 = vdwg.mxu0
  %v204 = vadd.f32 %v183, %v201
  %v205 = vmul.f32 %v204, 0.5
  %v206 = vtanh.pop %v205
  %v207 = vmul.f32 %v206, 0.5
  %v208 = vadd.f32 %v207, 0.5
  %v209 = vadd.f32 %v201, %v160
  %211 = vrot.lane.b32.xlu0 %v209, 64
  %v212 = vpop.permute.xlu0 %211
  %v214 = vmul.f32 %v208, %v212
  %216 = vrot.lane.b32.xlu0 %v214, 64
  %v217 = vpop.permute.xlu0 %216
  %v219 = vadd.f32 %v183, %v217
  %v220 = vtanh.pop %v219
  %v221 = vsub.f32 1.0, %v208
  %223 = vrot.lane.b32.xlu0 %v220, 96
  %v224 = vpop.permute.xlu0 %223
  %v226 = vmul.f32 %v221, %v224
  %v227 = vmul.f32 %v208, %v181
  %v228 = vadd.f32 %v226, %v227
  %s229 = scalar_lea.vmem [#allocation2], 16
  %v230 = vld [vmem:[%s229] sm:$0xff]
  %v231 = vpack.c.bf16 %v228, %v228
  %233 = vrot.lane.b32.xlu0 %v231, 96
  %v234 = vpop.permute.xlu0 %233
  %v236 = vsel %vm137, %v234, 0
  %238 = vmatpush.bf16.msra.mxu0 0
  %239 = vmatpush.bf16.msra.mxu0 0
  %240 = vmatpush.bf16.msra.mxu0 0
  %241 = vmatpush.bf16.msra.mxu0 0
  %242 = vmatpush.bf16.msra.mxu0 0
  %243 = vmatpush.bf16.msra.mxu0 0
  %244 = vmatpush.bf16.msra.mxu0 %v134
  %245 = vmatpush.bf16.msra.mxu0 %v133
  %246 = vmatmul.bf16.gmra.mxu0 %v236
  %v247 = vpop.f32.mrf.mxu0
  %v248 = vadd.f32 0.0, %v247
  %v249 = vpop.f32.mrf.mxu0
  %250 = vdwg.mxu0
  %v251 = vadd.f32 %v230, %v248
  %v252 = vmul.f32 %v251, 0.5
  %v253 = vtanh.pop %v252
  %v254 = vmul.f32 %v253, 0.5
  %v255 = vadd.f32 %v254, 0.5
  %v256 = vadd.f32 %v248, %v160
  %258 = vrot.lane.b32.xlu0 %v256, 64
  %v259 = vpop.permute.xlu0 %258
  %v261 = vmul.f32 %v255, %v259
  %263 = vrot.lane.b32.xlu0 %v261, 64
  %v264 = vpop.permute.xlu0 %263
  %v266 = vadd.f32 %v230, %v264
  %v267 = vtanh.pop %v266
  %v268 = vsub.f32 1.0, %v255
  %270 = vrot.lane.b32.xlu0 %v267, 96
  %v271 = vpop.permute.xlu0 %270
  %v273 = vmul.f32 %v268, %v271
  %v274 = vmul.f32 %v255, %v228
  %v275 = vadd.f32 %v273, %v274
  %s276 = scalar_lea.vmem [#allocation2], 24
  %v277 = vld [vmem:[%s276] sm:$0xff]
  %v278 = vpack.c.bf16 %v275, %v275
  %280 = vrot.lane.b32.xlu0 %v278, 96
  %v281 = vpop.permute.xlu0 %280
  %v283 = vsel %vm137, %v281, 0
  %285 = vmatpush.bf16.msra.mxu0 0
  %286 = vmatpush.bf16.msra.mxu0 0
  %287 = vmatpush.bf16.msra.mxu0 0
  %288 = vmatpush.bf16.msra.mxu0 0
  %289 = vmatpush.bf16.msra.mxu0 0
  %290 = vmatpush.bf16.msra.mxu0 0
  %291 = vmatpush.bf16.msra.mxu0 %v134
  %292 = vmatpush.bf16.msra.mxu0 %v133
  %293 = vmatmul.bf16.gmra.mxu0 %v283
  %v294 = vpop.f32.mrf.mxu0
  %v295 = vadd.f32 0.0, %v294
  %v296 = vpop.f32.mrf.mxu0
  %297 = vdwg.mxu0
  %v298 = vadd.f32 %v277, %v295
  %v299 = vmul.f32 %v298, 0.5
  %v300 = vtanh.pop %v299
  %v301 = vmul.f32 %v300, 0.5
  %v302 = vadd.f32 %v301, 0.5
  %v303 = vadd.f32 %v295, %v160
  %305 = vrot.lane.b32.xlu0 %v303, 64
  %v306 = vpop.permute.xlu0 %305
  %v308 = vmul.f32 %v302, %v306
  %310 = vrot.lane.b32.xlu0 %v308, 64
  %v311 = vpop.permute.xlu0 %310
  %v313 = vadd.f32 %v277, %v311
  %v314 = vtanh.pop %v313
  %v315 = vsub.f32 1.0, %v302
  %317 = vrot.lane.b32.xlu0 %v314, 96
  %v318 = vpop.permute.xlu0 %317
  %v320 = vmul.f32 %v315, %v318
  %v321 = vmul.f32 %v302, %v275
  %v322 = vadd.f32 %v320, %v321
  %s323 = scalar_lea.vmem [#allocation2], 32
  %v324 = vld [vmem:[%s323] sm:$0xff]
  %v325 = vpack.c.bf16 %v322, %v322
  %327 = vrot.lane.b32.xlu0 %v325, 96
  %v328 = vpop.permute.xlu0 %327
  %v330 = vsel %vm137, %v328, 0
  %332 = vmatpush.bf16.msra.mxu0 0
  %333 = vmatpush.bf16.msra.mxu0 0
  %334 = vmatpush.bf16.msra.mxu0 0
  %335 = vmatpush.bf16.msra.mxu0 0
  %336 = vmatpush.bf16.msra.mxu0 0
  %337 = vmatpush.bf16.msra.mxu0 0
  %338 = vmatpush.bf16.msra.mxu0 %v134
  %339 = vmatpush.bf16.msra.mxu0 %v133
  %340 = vmatmul.bf16.gmra.mxu0 %v330
  %v341 = vpop.f32.mrf.mxu0
  %v342 = vadd.f32 0.0, %v341
  %v343 = vpop.f32.mrf.mxu0
  %344 = vdwg.mxu0
  %v345 = vadd.f32 %v324, %v342
  %v346 = vmul.f32 %v345, 0.5
  %v347 = vtanh.pop %v346
  %v348 = vmul.f32 %v347, 0.5
  %v349 = vadd.f32 %v348, 0.5
  %v350 = vadd.f32 %v342, %v160
  %352 = vrot.lane.b32.xlu0 %v350, 64
  %v353 = vpop.permute.xlu0 %352
  %v355 = vmul.f32 %v349, %v353
  %357 = vrot.lane.b32.xlu0 %v355, 64
  %v358 = vpop.permute.xlu0 %357
  %v360 = vadd.f32 %v324, %v358
  %v361 = vtanh.pop %v360
  %v362 = vsub.f32 1.0, %v349
  %364 = vrot.lane.b32.xlu0 %v361, 96
  %v365 = vpop.permute.xlu0 %364
  %v367 = vmul.f32 %v362, %v365
  %v368 = vmul.f32 %v349, %v322
  %v369 = vadd.f32 %v367, %v368
  %s370 = scalar_lea.vmem [#allocation2], 40
  %v371 = vld [vmem:[%s370] sm:$0xff]
  %v372 = vpack.c.bf16 %v369, %v369
  %374 = vrot.lane.b32.xlu0 %v372, 96
  %v375 = vpop.permute.xlu0 %374
  %v377 = vsel %vm137, %v375, 0
  %379 = vmatpush.bf16.msra.mxu0 0
  %380 = vmatpush.bf16.msra.mxu0 0
  %381 = vmatpush.bf16.msra.mxu0 0
  %382 = vmatpush.bf16.msra.mxu0 0
  %383 = vmatpush.bf16.msra.mxu0 0
  %384 = vmatpush.bf16.msra.mxu0 0
  %385 = vmatpush.bf16.msra.mxu0 %v134
  %386 = vmatpush.bf16.msra.mxu0 %v133
  %387 = vmatmul.bf16.gmra.mxu0 %v377
  %v388 = vpop.f32.mrf.mxu0
  %v389 = vadd.f32 0.0, %v388
  %v390 = vpop.f32.mrf.mxu0
  %391 = vdwg.mxu0
  %v392 = vadd.f32 %v371, %v389
  %v393 = vmul.f32 %v392, 0.5
  %v394 = vtanh.pop %v393
  %v395 = vmul.f32 %v394, 0.5
  %v396 = vadd.f32 %v395, 0.5
  %v397 = vadd.f32 %v389, %v160
  %399 = vrot.lane.b32.xlu0 %v397, 64
  %v400 = vpop.permute.xlu0 %399
  %v402 = vmul.f32 %v396, %v400
  %404 = vrot.lane.b32.xlu0 %v402, 64
  %v405 = vpop.permute.xlu0 %404
  %v407 = vadd.f32 %v371, %v405
  %v408 = vtanh.pop %v407
  %v409 = vsub.f32 1.0, %v396
  %411 = vrot.lane.b32.xlu0 %v408, 96
  %v412 = vpop.permute.xlu0 %411
  %v414 = vmul.f32 %v409, %v412
  %v415 = vmul.f32 %v396, %v369
  %v416 = vadd.f32 %v414, %v415
  %s417 = scalar_lea.vmem [#allocation2], 48
  %v418 = vld [vmem:[%s417] sm:$0xff]
  %v419 = vpack.c.bf16 %v416, %v416
  %421 = vrot.lane.b32.xlu0 %v419, 96
  %v422 = vpop.permute.xlu0 %421
  %v424 = vsel %vm137, %v422, 0
  %426 = vmatpush.bf16.msra.mxu0 0
  %427 = vmatpush.bf16.msra.mxu0 0
  %428 = vmatpush.bf16.msra.mxu0 0
  %429 = vmatpush.bf16.msra.mxu0 0
  %430 = vmatpush.bf16.msra.mxu0 0
  %431 = vmatpush.bf16.msra.mxu0 0
  %432 = vmatpush.bf16.msra.mxu0 %v134
  %433 = vmatpush.bf16.msra.mxu0 %v133
  %434 = vmatmul.bf16.gmra.mxu0 %v424
  %v435 = vpop.f32.mrf.mxu0
  %v436 = vadd.f32 0.0, %v435
  %v437 = vpop.f32.mrf.mxu0
  %438 = vdwg.mxu0
  %v439 = vadd.f32 %v418, %v436
  %v440 = vmul.f32 %v439, 0.5
  %v441 = vtanh.pop %v440
  %v442 = vmul.f32 %v441, 0.5
  %v443 = vadd.f32 %v442, 0.5
  %v444 = vadd.f32 %v436, %v160
  %446 = vrot.lane.b32.xlu0 %v444, 64
  %v447 = vpop.permute.xlu0 %446
  %v449 = vmul.f32 %v443, %v447
  %451 = vrot.lane.b32.xlu0 %v449, 64
  %v452 = vpop.permute.xlu0 %451
  %v454 = vadd.f32 %v418, %v452
  %v455 = vtanh.pop %v454
  %v456 = vsub.f32 1.0, %v443
  %458 = vrot.lane.b32.xlu0 %v455, 96
  %v459 = vpop.permute.xlu0 %458
  %v461 = vmul.f32 %v456, %v459
  %v462 = vmul.f32 %v443, %v416
  %v463 = vadd.f32 %v461, %v462
  %s464 = scalar_lea.vmem [#allocation2], 56
  %v465 = vld [vmem:[%s464] sm:$0xff]
  %v466 = vpack.c.bf16 %v463, %v463
  %468 = vrot.lane.b32.xlu0 %v466, 96
  %v469 = vpop.permute.xlu0 %468
  %v471 = vsel %vm137, %v469, 0
  %473 = vmatpush.bf16.msra.mxu0 0
  %474 = vmatpush.bf16.msra.mxu0 0
  %475 = vmatpush.bf16.msra.mxu0 0
  %476 = vmatpush.bf16.msra.mxu0 0
  %477 = vmatpush.bf16.msra.mxu0 0
  %478 = vmatpush.bf16.msra.mxu0 0
  %479 = vmatpush.bf16.msra.mxu0 %v134
  %480 = vmatpush.bf16.msra.mxu0 %v133
  %481 = vmatmul.bf16.gmra.mxu0 %v471
  %v482 = vpop.f32.mrf.mxu0
  %v483 = vadd.f32 0.0, %v482
  %v484 = vpop.f32.mrf.mxu0
  %485 = vdwg.mxu0
  %v486 = vadd.f32 %v465, %v483
  %v487 = vmul.f32 %v486, 0.5
  %v488 = vtanh.pop %v487
  %v489 = vmul.f32 %v488, 0.5
  %v490 = vadd.f32 %v489, 0.5
  %v491 = vadd.f32 %v483, %v160
  %493 = vrot.lane.b32.xlu0 %v491, 64
  %v494 = vpop.permute.xlu0 %493
  %v496 = vmul.f32 %v490, %v494
  %498 = vrot.lane.b32.xlu0 %v496, 64
  %v499 = vpop.permute.xlu0 %498
  %v501 = vadd.f32 %v465, %v499
  %v502 = vtanh.pop %v501
  %v503 = vsub.f32 1.0, %v490
  %505 = vrot.lane.b32.xlu0 %v502, 96
  %v506 = vpop.permute.xlu0 %505
  %v508 = vmul.f32 %v503, %v506
  %v509 = vmul.f32 %v490, %v463
  %v510 = vadd.f32 %v508, %v509
  %v511 = vpack.c.bf16 %v510, %v510
  %v512 = vld [vmem:[%s5] sm:$0xf]
  %v513 = vld [vmem:[%s5 + $0x4] sm:$0xf]
  %v514 = vld [vmem:[%s5 + $0x8] sm:$0xf]
  %v515 = vld [vmem:[%s5 + $0xc] sm:$0xf]
  %v516 = vld [vmem:[%s6] sm:$0x1]
  %v518 = vperm.slane %v516, 0
  %521 = vrot.lane.b32.xlu0 %v511, 96
  %v522 = vpop.permute.xlu0 %521
  %v527 = vunpack.c.l.b16 %v512
  %v528 = vunpack.c.l.b16 %v513
  %v529 = vunpack.c.l.b16 %v514
  %v530 = vunpack.c.l.b16 %v515
  %v531 = vpack.c.b16 %v528, %v527
  %v532 = vpack.c.b16 %v530, %v529
  %v536 = vsel %vm137, %v522, 0
  %538 = vmatpush.bf16.msra.mxu0 0
  %539 = vmatpush.bf16.msra.mxu0 0
  %540 = vmatpush.bf16.msra.mxu0 0
  %541 = vmatpush.bf16.msra.mxu0 0
  %542 = vmatpush.bf16.msra.mxu0 0
  %543 = vmatpush.bf16.msra.mxu0 0
  %544 = vmatpush.bf16.msra.mxu0 %v532
  %545 = vmatpush.bf16.msra.mxu0 %v531
  %546 = vmatmul.bf16.gmra.mxu0 %v536
  %v547 = vpop.f32.mrf.mxu0
  %v548 = vadd.f32 %v518, %v547
  %v549 = vpop.f32.mrf.mxu0
  %550 = vdwg.mxu0
  %551 = vst [vmem:[%s7] sm:$0xff] %v548
  // Predicated region
  $region30: #{rnn_regressor_forward.1} parent=0 // pred_check
    _
  $region31: #{rnn_regressor_forward.1} parent=0 // pred_check_branch
    %553 = sbr.rel (0) target = $region33
  $region32: #{rnn_regressor_forward.1} parent=0 // pred_region
    _
  $region33: #{rnn_regressor_forward.1} parent=0 // pred_fallthru
    _
  // Predicated region
  $region34: #{rnn_regressor_forward.1} parent=0 // pred_check
    _
  $region35: #{rnn_regressor_forward.1} parent=0 // pred_check_branch
    %555 = sbr.rel (0) target = $region37
  $region36: #{rnn_regressor_forward.1} parent=0 // pred_region
    _
  $region37: #{rnn_regressor_forward.1} parent=0 // pred_fallthru
    _

</llo_original>
